<compile_context>
chip_gen: v7x
topology: tpu7x:2x2x1
jax: 0.10.0
libtpu: 0.0.40
codegen_flags: <defaults>
</compile_context>

<pallas_src>
import functools

import jax
import jax.numpy as jnp
from jax import lax
from jax.experimental import pallas as pl
from jax.experimental.pallas import tpu as pltpu


_LANE = 128
_VMEM_LIMIT_BYTES = 32 * 1024 * 1024      # scoped-VMEM ceiling, safe on v5e/v6e/v7x
_STREAM_INPUT_BUDGET = 24 * 1024 * 1024   # 2 tensors x 2 pipeline buffers of (tile_b, S)
_GATHER_MIN_SEQ = 1024                    # streamed path is the fallback below this


def _round_up(x, m):
    return ((x + m - 1) // m) * m


def _cap_for_two_cores(batch_size, tile_b):
    """Cap tile_b so the batch grid has >= 2 steps when B > 8 (v7x megacore)."""
    if batch_size > 8:
        tile_b = min(tile_b, max(8, _round_up(pl.cdiv(batch_size, 2), 8)))
    return tile_b


def _choose_stream_tile(batch_size, seq_len, itemsize):
    """Largest batch tile whose 2 tensors x 2 pipeline buffers fit the budget."""
    per_row = 2 * 2 * seq_len * itemsize
    cap = max(8, _STREAM_INPUT_BUDGET // max(per_row, 1))
    cap = _cap_for_two_cores(batch_size, cap)
    if batch_size <= 8:
        return batch_size                      # whole (tiny) batch, full-dim block
    return max(8, min((cap // 8) * 8, _round_up(batch_size, 8)))


def _choose_gather_tile(batch_size):
    cap = _cap_for_two_cores(batch_size, 512)  # VMEM cost is tiny (tile_b x 128 lanes)
    if batch_size <= 8:
        return batch_size
    return max(8, min((cap // 8) * 8, _round_up(batch_size, 8)))


# --------------------------------------------------------------------------
# Streamed path: auto-pipelined (tile_b, S) tiles.
# --------------------------------------------------------------------------
def _mcloss_stream_kernel(ans_ref, ps_ref, pe_ref, out_ref, *, batch_size, tile_b):
    # ans_ref: (tile_b, 2) int32; ps_ref/pe_ref: (tile_b, S) native dtype.
    ps = ps_ref[...]                       # keep native dtype (deferred f32 cast)
    pe = pe_ref[...]
    tb, s = ps.shape

    a0 = ans_ref[:, 0:1]                   # (tile_b, 1)
    a1 = ans_ref[:, 1:2]
    col = lax.broadcasted_iota(jnp.int32, (tb, s), 1)

    # Select + lane-reduce gather in native dtype; only the single gathered
    # value per row is widened to f32.
    g0 = jnp.sum(jnp.where(col == a0, ps, jnp.zeros_like(ps)),
                 axis=1, keepdims=True).astype(jnp.float32)
    g1 = jnp.sum(jnp.where(col == a1, pe, jnp.zeros_like(pe)),
                 axis=1, keepdims=True).astype(jnp.float32)

    # Mask padded tail rows BEFORE the log so no NaN/-inf is produced.
    row = pl.program_id(0) * tile_b + lax.broadcasted_iota(jnp.int32, (tb, 1), 0)
    valid = row < batch_size
    g0 = jnp.where(valid, g0, 1.0)
    g1 = jnp.where(valid, g1, 1.0)

    partial = jnp.sum(jnp.log(g0) + jnp.log(g1))      # logs kept separate
    out_ref[...] = jnp.full(out_ref.shape, partial, dtype=out_ref.dtype)


def _mc_loss_stream(prob_start, prob_end, ans_bxk, tile_b):
    b, s = prob_start.shape
    grid_b = pl.cdiv(b, tile_b)
    kernel = functools.partial(_mcloss_stream_kernel, batch_size=b, tile_b=tile_b)

    partials = pl.pallas_call(
        kernel,
        out_shape=jax.ShapeDtypeStruct((grid_b, 8, _LANE), jnp.float32),
        grid=(grid_b,),
        in_specs=[
            pl.BlockSpec((tile_b, 2), lambda i: (i, 0)),   # answers
            pl.BlockSpec((tile_b, s), lambda i: (i, 0)),   # prob_start (native dtype)
            pl.BlockSpec((tile_b, s), lambda i: (i, 0)),   # prob_end   (native dtype)
        ],
        out_specs=pl.BlockSpec((1, 8, _LANE), lambda i: (i, 0, 0)),
        compiler_params=pltpu.CompilerParams(
            dimension_semantics=("parallel",),
            vmem_limit_bytes=_VMEM_LIMIT_BYTES,
        ),
    )(ans_bxk, prob_start, prob_end)

    return -jnp.sum(partials[:, 0, 0])


# --------------------------------------------------------------------------
# Gather path: scalar-prefetched answers + manual per-row 128-lane-window DMA.
# --------------------------------------------------------------------------
def _mcloss_gather_kernel(ans_sm_ref, ans_ref, ps_hbm, pe_hbm, out_ref,
                          ps_buf, pe_buf, sem, *, batch_size, tile_b):
    # ans_sm_ref: SMEM (2, B) int32 (scalar prefetch, drives the DMA addresses)
    # ans_ref:    VMEM (tile_b, 2) int32 (vector copy, drives the lane select)
    # ps_hbm/pe_hbm: raw HBM refs (B, S)
    # ps_buf/pe_buf: VMEM (tile_b, 128) scratch, native dtype
    # sem: DMA semaphores, shape (2,)
    i = pl.program_id(0)
    base = i * tile_b

    # Issue one 128-lane aligned window DMA per row per tensor; all overlap.
    @pl.loop(0, tile_b)
    def _issue(r):
        row = jnp.minimum(base + r, batch_size - 1)        # clamp padded tail rows
        a0 = ans_sm_ref[0, row]
        a1 = ans_sm_ref[1, row]
        w0 = pl.multiple_of((a0 // _LANE) * _LANE, _LANE)   # S % 128 == 0 guaranteed
        w1 = pl.multiple_of((a1 // _LANE) * _LANE, _LANE)
        pltpu.make_async_copy(
            ps_hbm.at[pl.ds(row, 1), pl.ds(w0, _LANE)],
            ps_buf.at[pl.ds(r, 1), :],
            sem.at[0]).start()
        pltpu.make_async_copy(
            pe_hbm.at[pl.ds(row, 1), pl.ds(w1, _LANE)],
            pe_buf.at[pl.ds(r, 1), :],
            sem.at[1]).start()

    # One matching-size wait per issued copy (safe for byte- or count-semantics).
    @pl.loop(0, tile_b)
    def _drain(r):
        pltpu.make_async_copy(
            ps_hbm.at[pl.ds(0, 1), pl.ds(0, _LANE)],
            ps_buf.at[pl.ds(r, 1), :],
            sem.at[0]).wait()
        pltpu.make_async_copy(
            pe_hbm.at[pl.ds(0, 1), pl.ds(0, _LANE)],
            pe_buf.at[pl.ds(r, 1), :],
            sem.at[1]).wait()

    ps = ps_buf[...]                       # (tile_b, 128) native dtype
    pe = pe_buf[...]

    lane0 = ans_ref[:, 0:1] % _LANE        # position of the answer inside its window
    lane1 = ans_ref[:, 1:2] % _LANE
    col = lax.broadcasted_iota(jnp.int32, (tile_b, _LANE), 1)

    g0 = jnp.sum(jnp.where(col == lane0, ps, jnp.zeros_like(ps)),
                 axis=1, keepdims=True).astype(jnp.float32)
    g1 = jnp.sum(jnp.where(col == lane1, pe, jnp.zeros_like(pe)),
                 axis=1, keepdims=True).astype(jnp.float32)

    row_ids = base + lax.broadcasted_iota(jnp.int32, (tile_b, 1), 0)
    valid = row_ids < batch_size
    g0 = jnp.where(valid, g0, 1.0)
    g1 = jnp.where(valid, g1, 1.0)

    partial = jnp.sum(jnp.log(g0) + jnp.log(g1))
    out_ref[...] = jnp.full(out_ref.shape, partial, dtype=out_ref.dtype)


def _mc_loss_gather(prob_start, prob_end, ans_bxk, ans_kxb, tile_b):
    b, s = prob_start.shape
    grid_b = pl.cdiv(b, tile_b)
    kernel = functools.partial(_mcloss_gather_kernel, batch_size=b, tile_b=tile_b)

    grid_spec = pltpu.PrefetchScalarGridSpec(
        num_scalar_prefetch=1,
        grid=(grid_b,),
        in_specs=[
            pl.BlockSpec((tile_b, 2), lambda i, *_: (i, 0)),   # answers (VMEM)
            pl.BlockSpec(memory_space=pl.ANY),                 # prob_start stays in HBM
            pl.BlockSpec(memory_space=pl.ANY),                 # prob_end stays in HBM
        ],
        out_specs=pl.BlockSpec((1, 8, _LANE), lambda i, *_: (i, 0, 0)),
        scratch_shapes=[
            pltpu.VMEM((tile_b, _LANE), prob_start.dtype),
            pltpu.VMEM((tile_b, _LANE), prob_end.dtype),
            pltpu.SemaphoreType.DMA((2,)),
        ],
    )

    partials = pl.pallas_call(
        kernel,
        out_shape=jax.ShapeDtypeStruct((grid_b, 8, _LANE), jnp.float32),
        grid_spec=grid_spec,
        compiler_params=pltpu.CompilerParams(
            dimension_semantics=("parallel",),
            vmem_limit_bytes=_VMEM_LIMIT_BYTES,
        ),
    )(ans_kxb, ans_bxk, prob_start, prob_end)

    return -jnp.sum(partials[:, 0, 0])


# --------------------------------------------------------------------------
# Public wrapper.
# --------------------------------------------------------------------------
def _mc_loss_impl(prob_start, prob_end, answer, tile_b=None):
    b, s = prob_start.shape
    assert prob_end.shape == (b, s)

    ans_kxb = jnp.asarray(answer).astype(jnp.int32)     # (2, B) for SMEM prefetch
    ans_bxk = jnp.transpose(ans_kxb)                    # (B, 2) for VMEM streaming

    use_gather = (s >= _GATHER_MIN_SEQ) and (s % _LANE == 0)
    if use_gather:
        tb = tile_b if tile_b is not None else _choose_gather_tile(b)
        return _mc_loss_gather(prob_start, prob_end, ans_bxk, ans_kxb, tb)

    itemsize = jnp.dtype(prob_start.dtype).itemsize
    tb = tile_b if tile_b is not None else _choose_stream_tile(b, s, itemsize)
    return _mc_loss_stream(prob_start, prob_end, ans_bxk, tb)


mc_loss = jax.jit(_mc_loss_impl, static_argnames=("tile_b",))


def mc_loss_ref(prob_start, prob_end, answer):
    b = prob_start.shape[0]
    idx = jnp.arange(b)
    p1 = jnp.log(prob_start[idx, answer[0]])
    p2 = jnp.log(prob_end[idx, answer[1]])
    return -jnp.sum(p1 + p2)


def _make_inputs(key, b, s, dtype=jnp.float32):
    k1, k2, k3, k4 = jax.random.split(key, 4)
    ps = jax.nn.softmax(jax.random.normal(k1, (b, s), jnp.float32), axis=-1).astype(dtype)
    pe = jax.nn.softmax(jax.random.normal(k2, (b, s), jnp.float32), axis=-1).astype(dtype)
    ans = jnp.stack(
        [jax.random.randint(k3, (b,), 0, s, dtype=jnp.int32),
         jax.random.randint(k4, (b,), 0, s, dtype=jnp.int32)], axis=0)   # [2, B]
    return ps, pe, ans


if __name__ == "__main__":
    root = jax.random.PRNGKey(0)
    keys = jax.random.split(root, 5)

    # --- Test 1: module-spec small shapes (f32, streamed, single tile) ---
    ps, pe, ans = _make_inputs(keys[0], 4, 16)
    loss = mc_loss(ps, pe, ans)
    jax.block_until_ready(loss)
    ref = mc_loss_ref(ps, pe, ans)
    assert jnp.allclose(loss, ref, rtol=1e-5, atol=1e-5), (loss, ref)

    # --- Test 2: streamed multi-tile grid + partial-tile masking ---
    ps2, pe2, ans2 = _make_inputs(keys[1], 20, 256)
    loss2 = mc_loss(ps2, pe2, ans2, tile_b=8)          # grid of 3, last tile masked
    jax.block_until_ready(loss2)
    ref2 = mc_loss_ref(ps2, pe2, ans2)
    assert jnp.allclose(loss2, ref2, rtol=1e-5, atol=1e-5), (loss2, ref2)

    # --- Test 3: native bf16 streaming, deferred f32 cast ---
    ps_bf, pe_bf = ps.astype(jnp.bfloat16), pe.astype(jnp.bfloat16)
    loss3 = mc_loss(ps_bf, pe_bf, ans)
    jax.block_until_ready(loss3)
    ref3 = mc_loss_ref(ps_bf.astype(jnp.float32), pe_bf.astype(jnp.float32), ans)
    assert jnp.allclose(loss3, ref3, rtol=1e-4, atol=1e-4), (loss3, ref3)

    # --- Test 4: gather path (scalar prefetch + manual window DMA), f32 ---
    ps4, pe4, ans4 = _make_inputs(keys[2], 12, 1024)   # grid of 2, padded tail rows
    loss4 = mc_loss(ps4, pe4, ans4)
    jax.block_until_ready(loss4)
    ref4 = mc_loss_ref(ps4, pe4, ans4)
    assert jnp.allclose(loss4, ref4, rtol=1e-5, atol=1e-4), (loss4, ref4)

    # --- Test 5: gather path with native bf16 inputs ---
    ps5, pe5, ans5 = _make_inputs(keys[3], 16, 1280, dtype=jnp.bfloat16)
    loss5 = mc_loss(ps5, pe5, ans5)
    jax.block_until_ready(loss5)
    ref5 = mc_loss_ref(ps5.astype(jnp.float32), pe5.astype(jnp.float32), ans5)
    assert jnp.allclose(loss5, ref5, rtol=1e-4, atol=1e-4), (loss5, ref5)

    print("KERNEL_OK")
</pallas_src>

<mosaic_0001>
module attributes {stable_mosaic.version = 11 : i64} {
  func.func @_mcloss_stream_kernel(%arg0: i32, %arg1: memref<4x2xi32, #tpu.memory_space<vmem>>, %arg2: memref<4x16xf32, #tpu.memory_space<vmem>>, %arg3: memref<4x16xf32, #tpu.memory_space<vmem>>, %arg4: memref<1x8x128xf32, #tpu.memory_space<vmem>>) attributes {dimension_semantics = [#tpu.dimension_semantics<parallel>], iteration_bounds = array<i64: 1>, scalar_prefetch = 0 : i64, scratch_operands = 0 : i64, tpu.core_type = #tpu.core_type<tc>, window_params = [{transform_indices = @transform_0, window_bounds = array<i64: 4, 2>}, {transform_indices = @transform_1, window_bounds = array<i64: 4, 16>}, {transform_indices = @transform_2, window_bounds = array<i64: 4, 16>}, {transform_indices = @transform_3, window_bounds = array<i64: 1, 8, 128>}]} {
    %c0 = arith.constant 0 : index
    %c0_0 = arith.constant 0 : index
    %0 = vector.load %arg2[%c0, %c0_0] : memref<4x16xf32, #tpu.memory_space<vmem>>, vector<4x16xf32>
    %c0_1 = arith.constant 0 : index
    %c0_2 = arith.constant 0 : index
    %1 = vector.load %arg3[%c0_1, %c0_2] : memref<4x16xf32, #tpu.memory_space<vmem>>, vector<4x16xf32>
    %c0_3 = arith.constant 0 : index
    %c0_4 = arith.constant 0 : index
    %2 = vector.load %arg1[%c0_3, %c0_4] : memref<4x2xi32, #tpu.memory_space<vmem>>, vector<4x1xi32>
    %c0_5 = arith.constant 0 : index
    %c1 = arith.constant 1 : index
    %3 = vector.load %arg1[%c0_5, %c1] : memref<4x2xi32, #tpu.memory_space<vmem>>, vector<4x1xi32>
    %4 = tpu.iota {dimensions = array<i32: 1>} : vector<4x16xi32>
    %5 = vector.broadcast %2 : vector<4x1xi32> to vector<4x16xi32>
    %6 = arith.cmpi eq, %4, %5 : vector<4x16xi32>
    %cst = arith.constant 0.000000e+00 : f32
    %7 = vector.broadcast %cst : f32 to vector<4x16xf32>
    %8 = arith.select %6, %0, %7 : vector<4x16xi1>, vector<4x16xf32>
    %cst_6 = arith.constant dense<0.000000e+00> : vector<4xf32>
    %9 = vector.multi_reduction <add>, %8, %cst_6 [1] : vector<4x16xf32> to vector<4xf32>
    %10 = vector.shape_cast %9 : vector<4xf32> to vector<4x1xf32>
    %11 = vector.broadcast %3 : vector<4x1xi32> to vector<4x16xi32>
    %12 = arith.cmpi eq, %4, %11 : vector<4x16xi32>
    %cst_7 = arith.constant 0.000000e+00 : f32
    %13 = vector.broadcast %cst_7 : f32 to vector<4x16xf32>
    %14 = arith.select %12, %1, %13 : vector<4x16xi1>, vector<4x16xf32>
    %cst_8 = arith.constant dense<0.000000e+00> : vector<4xf32>
    %15 = vector.multi_reduction <add>, %14, %cst_8 [1] : vector<4x16xf32> to vector<4xf32>
    %16 = vector.shape_cast %15 : vector<4xf32> to vector<4x1xf32>
    %c4_i32 = arith.constant 4 : i32
    %17 = arith.muli %arg0, %c4_i32 : i32
    %18 = tpu.iota {dimensions = array<i32: 0>} : vector<4x1xi32>
    %19 = vector.broadcast %17 : i32 to vector<4x1xi32>
    %20 = arith.addi %19, %18 : vector<4x1xi32>
    %c4_i32_9 = arith.constant 4 : i32
    %21 = vector.broadcast %c4_i32_9 : i32 to vector<4x1xi32>
    %22 = arith.cmpi slt, %20, %21 : vector<4x1xi32>
    %cst_10 = arith.constant 1.000000e+00 : f32
    %23 = vector.broadcast %cst_10 : f32 to vector<4x1xf32>
    %24 = arith.select %22, %10, %23 : vector<4x1xi1>, vector<4x1xf32>
    %cst_11 = arith.constant 1.000000e+00 : f32
    %25 = vector.broadcast %cst_11 : f32 to vector<4x1xf32>
    %26 = arith.select %22, %16, %25 : vector<4x1xi1>, vector<4x1xf32>
    %27 = math.log %24 : vector<4x1xf32>
    %28 = math.log %26 : vector<4x1xf32>
    %29 = arith.addf %27, %28 : vector<4x1xf32>
    %30 = vector.shape_cast %29 : vector<4x1xf32> to vector<1x4x1xf32>
    %cst_12 = arith.constant dense<0.000000e+00> : vector<1xf32>
    %31 = vector.multi_reduction <add>, %30, %cst_12 [1, 2] : vector<1x4x1xf32> to vector<1xf32>
    %32 = vector.shape_cast %31 : vector<1xf32> to vector<1x1x1xf32>
    %33 = vector.extract %32[0, 0, 0] : f32 from vector<1x1x1xf32>
    %34 = vector.broadcast %33 : f32 to vector<1x8x128xf32>
    %c0_13 = arith.constant 0 : index
    %c0_14 = arith.constant 0 : index
    %c0_15 = arith.constant 0 : index
    %35 = vector.load %arg4[%c0_13, %c0_14, %c0_15] : memref<1x8x128xf32, #tpu.memory_space<vmem>>, vector<1x8x128xf32>
    tpu.vector_store %arg4[%c0_13, %c0_14, %c0_15], %34 {strides = array<i32>} : memref<1x8x128xf32, #tpu.memory_space<vmem>>, vector<1x8x128xf32>,
    return
  }
  func.func @transform_0(%arg0: i32) -> (i32, i32) {
    %c0_i32 = arith.constant 0 : i32
    %c0_i32_0 = arith.constant 0 : i32
    return %arg0, %c0_i32 : i32, i32
  }
  func.func @transform_1(%arg0: i32) -> (i32, i32) {
    %c0_i32 = arith.constant 0 : i32
    %c0_i32_0 = arith.constant 0 : i32
    return %arg0, %c0_i32 : i32, i32
  }
  func.func @transform_2(%arg0: i32) -> (i32, i32) {
    %c0_i32 = arith.constant 0 : i32
    %c0_i32_0 = arith.constant 0 : i32
    return %arg0, %c0_i32 : i32, i32
  }
  func.func @transform_3(%arg0: i32) -> (i32, i32, i32) {
    %c0_i32 = arith.constant 0 : i32
    %c0_i32_0 = arith.constant 0 : i32
    %c0_i32_1 = arith.constant 0 : i32
    return %arg0, %c0_i32, %c0_i32_0 : i32, i32, i32
  }
}

</mosaic_0001>

<llo_original>
// kernel: _mc_loss_impl.1
$region0: #{_mc_loss_impl.1}
  #allocation0 [shape = 'u32[]', space=smem, size = 0x4, offset = 0x4, fixed_abs, tag = 'smem constant byte address 0x4 - core index']
  #allocation1 [shape = 'u32[144,128]{1,0:T(1,128)}', space=vmem, size = 0x12000, scoped, tag = 'internal scratch']
  %s0 = inlined_call_operand.vmem [shape: s32[4,2], index: 0, kind: input, shape index: {}]
  %s1 = inlined_call_operand.vmem [shape: f32[4,16], index: 1, kind: input, shape index: {}]
  %s2 = inlined_call_operand.vmem [shape: f32[4,16], index: 2, kind: input, shape index: {}]
  %s3 = inlined_call_operand.vmem [shape: f32[1,8,128], index: 3, kind: output, shape index: {}]
  %s4 = sld [smem:[#allocation0]]
  $region22: #{_mc_loss_impl.1} parent=0
    _
  %s6 = ssub.s32 1, %s4
  %s7 = scalar_select 0, %s6, %s4
  // Predicated region
  $region2: #{_mc_loss_impl.1} parent=0 // pred_check
    _
  $region3: #{_mc_loss_impl.1} parent=0 // pred_check_branch
    %9 = sbr.rel (0) target = $region5
  $region4: #{_mc_loss_impl.1} parent=0 // pred_region
    _
  $region5: #{_mc_loss_impl.1} parent=0 // pred_fallthru
    _
  // Predicated region
  $region6: #{_mc_loss_impl.1} parent=0 // pred_check
    _
  $region7: #{_mc_loss_impl.1} parent=0 // pred_check_branch
    %11 = sbr.rel (0) target = $region9
  $region8: #{_mc_loss_impl.1} parent=0 // pred_region
    _
  $region9: #{_mc_loss_impl.1} parent=0 // pred_fallthru
    _
  // Predicated region
  $region10: #{_mc_loss_impl.1} parent=0 // pred_check
    _
  $region11: #{_mc_loss_impl.1} parent=0 // pred_check_branch
    %13 = sbr.rel (0) target = $region13
  $region12: #{_mc_loss_impl.1} parent=0 // pred_region
    _
  $region13: #{_mc_loss_impl.1} parent=0 // pred_fallthru
    _
  %v14 = vld [vmem:[%s1] sm:$0xf]
  %v15 = vld [vmem:[%s2] sm:$0xf]
  %v16 = vld [vmem:[%s0] sm:$0xf]
  %v17 = vlaneseq
  %v18 = vand.u32 %v17, 127
  %19 = vset.pattern.permute.xlu0 0
  %20 = vperm.xlu0 %19, %v16
  %v21 = vpop.permute.xlu0 %20
  %vm22 = vcmp.eq.s32.totalorder %v18, %v21
  %v23 = vsel %vm22, %v14, 0.0
  %vm24 = vcmask 125952
  %v25 = vsel %vm24, %v23, 0.0
  %26 = vadd.xlane.f32.xlu0 %v25
  %v27 = vpop.xlane.xlu0 %26
  %28 = vset.pattern.permute.xlu0 1
  %29 = vperm.xlu0 %28, %v16
  %v30 = vpop.permute.xlu0 %29
  %vm31 = vcmp.eq.s32.totalorder %v18, %v30
  %v32 = vsel %vm31, %v15, 0.0
  %v33 = vsel %vm24, %v32, 0.0
  %34 = vadd.xlane.f32.xlu0 %v33
  %v35 = vpop.xlane.xlu0 %34
  %s36 = smul.u32 0, 4
  %v37 = vlaneseq
  %v38 = vshrl.u32 %v37, 7
  %v39 = vstv %s36
  %v40 = vadd.s32 %v39, %v38
  %vm41 = vcmp.lt.s32.totalorder %v40, 4
  %v42 = vsel %vm41, %v27, 1.0
  %v43 = vsel %vm41, %v35, 1.0
  %v44 = vlog2.pop %v42
  %v45 = vmul.f32 %v44, 0.6931472
  %v46 = vlog2.pop %v43
  %v47 = vmul.f32 %v46, 0.6931472
  %v48 = vadd.f32 %v45, %v47
  %vm49 = vcmask 3072
  %v50 = vsel %vm49, %v48, 0.0
  %51 = vadd.xlane.f32.xlu0 %v50
  %v52 = vpop.xlane.xlu0 %51
  %v53 = vrot.slane %v52, 4
  %v54 = vadd.f32 %v52, %v53
  %v55 = vrot.slane %v54, 2
  %v56 = vadd.f32 %v54, %v55
  %v57 = vrot.slane %v56, 1
  %v58 = vadd.f32 %v56, %v57
  %s59 = vtos %v58
  %v60 = vstv %s59
  %61 = vst [vmem:[%s3] sm:$0xff] %v60
  // Predicated region
  $region14: #{_mc_loss_impl.1} parent=0 // pred_check
    _
  $region15: #{_mc_loss_impl.1} parent=0 // pred_check_branch
    %63 = sbr.rel (0) target = $region17
  $region16: #{_mc_loss_impl.1} parent=0 // pred_region
    _
  $region17: #{_mc_loss_impl.1} parent=0 // pred_fallthru
    _
  // Predicated region
  $region18: #{_mc_loss_impl.1} parent=0 // pred_check
    _
  $region19: #{_mc_loss_impl.1} parent=0 // pred_check_branch
    %65 = sbr.rel (0) target = $region21
  $region20: #{_mc_loss_impl.1} parent=0 // pred_region
    _
  $region21: #{_mc_loss_impl.1} parent=0 // pred_fallthru
    _

</llo_original>
